<compile_context>
chip_gen: v6e
topology: v6e:2x2x1
jax: 0.10.0
libtpu: 0.0.40
codegen_flags: <defaults>
</compile_context>

<pallas_src>
import functools

import jax
import jax.numpy as jnp
from jax.experimental import pallas as pl
from jax.experimental.pallas import tpu as pltpu


def _round_up(x, m):
    return (x + m - 1) // m * m


def _sublane_align(dtype):
    # Sub-32-bit dtypes pack along sublanes: f32 -> 8, bf16 -> 16, int8 -> 32.
    return max(8, 32 // jnp.dtype(dtype).itemsize)


def _pick_tile(dim_aligned, pref, align):
    """Largest multiple of `align` that divides dim_aligned and is <= pref."""
    t = max(align, min((pref // align) * align, dim_aligned))
    while dim_aligned % t:
        t -= align
    return t


def _device_kind():
    try:
        return jax.devices()[0].device_kind.lower()
    except Exception:  # pragma: no cover - CPU fallback during tracing tools
        return ""


def _generation_config():
    kind = _device_kind()
    if "v7" in kind:
        # v7x: 64 MiB physical VMEM, 2 TCs/chip, 3.2 TB/s HBM -> modest tiles
        # still hit roofline; keep double-buffered footprint well under 32 MiB.
        return dict(tm=256, tn=512, tk=1024, vmem_cap=28 << 20, two_tc=True)
    if "v6" in kind:
        # v6e: 128 MiB VMEM -> bigger streamed-weight tiles, raise scoped cap.
        return dict(tm=256, tn=1024, tk=2048, vmem_cap=100 << 20, two_tc=False)
    # v5e (and default): 128 MiB physical, 16 MiB scoped default -> raise it.
    return dict(tm=256, tn=512, tk=1024, vmem_cap=96 << 20, two_tc=False)


# ----------------------------------------------------------------------------
# Kernels
# ----------------------------------------------------------------------------
def _linear_small_kernel(x_ref, w_ref, b_ref, o_ref):
    # Whole problem in one VMEM block: single MXU matmul + VPU bias add.
    o_ref[...] = (
        jnp.dot(x_ref[...], w_ref[...], preferred_element_type=jnp.float32)
        + b_ref[...]
    ).astype(o_ref.dtype)


def _linear_kernel_f32_out(x_ref, w_ref, b_ref, o_ref):
    # f32 output: accumulate directly into the resident output tile (its block
    # index ignores k), no scratch accumulator needed.
    @pl.when(pl.program_id(2) == 0)
    def _init():
        o_ref[...] = jnp.broadcast_to(b_ref[...], o_ref.shape)

    o_ref[...] += jnp.dot(
        x_ref[...], w_ref[...], preferred_element_type=jnp.float32
    )


def _linear_kernel_scratch(x_ref, w_ref, b_ref, o_ref, acc_ref):
    # Non-f32 output: f32 VMEM accumulator, bias add + cast on the last k step.
    k = pl.program_id(2)

    @pl.when(k == 0)
    def _init():
        acc_ref[...] = jnp.zeros_like(acc_ref)

    acc_ref[...] += jnp.dot(
        x_ref[...], w_ref[...], preferred_element_type=jnp.float32
    )

    @pl.when(k == pl.num_programs(2) - 1)
    def _finalize():
        o_ref[...] = (acc_ref[...] + b_ref[...]).astype(o_ref.dtype)


# ----------------------------------------------------------------------------
# Wrappers
# ----------------------------------------------------------------------------
def _linear_small(x, w, b2):
    B = x.shape[0]
    d_out = w.shape[1]
    return pl.pallas_call(
        _linear_small_kernel,
        out_shape=jax.ShapeDtypeStruct((B, d_out), x.dtype),
    )(x, w, b2)


@functools.partial(
    jax.jit, static_argnames=("tm", "tn", "tk", "d_out", "vmem_cap")
)
def _linear_large(x, wp, bp, *, tm, tn, tk, d_out, vmem_cap):
    B, d_in = x.shape
    Kp, Np = wp.shape
    Bp = _round_up(B, tm)  # tm was picked to divide the sublane-aligned batch

    # Only x is padded per call (W/b were padded once at setup); skip the pad
    # op entirely when already aligned.
    if Bp == B and Kp == d_in:
        xp = x
    else:
        xp = jnp.pad(x, ((0, Bp - B), (0, Kp - d_in)))

    grid = (Bp // tm, Np // tn, Kp // tk)
    itemsize = jnp.dtype(x.dtype).itemsize

    # Advisory cost for XLA scheduling: account for grid revisits (x is re-read
    # per N tile, W per M tile).
    cost = pl.CostEstimate(
        flops=2 * Bp * Kp * Np,
        transcendentals=0,
        bytes_accessed=(
            Bp * Kp * grid[1]
            + Kp * Np * grid[0]
            + Np * grid[0] * grid[2]
            + Bp * Np
        )
        * itemsize,
    )

    out_is_f32 = jnp.dtype(x.dtype) == jnp.float32
    kernel = _linear_kernel_f32_out if out_is_f32 else _linear_kernel_scratch
    scratch = [] if out_is_f32 else [pltpu.VMEM((tm, tn), jnp.float32)]

    # Double-buffered x/W/bias/out tiles (+ f32 acc if present), 2x headroom,
    # capped at the per-generation scoped-VMEM budget.
    vmem_bytes = 2 * (tm * tk + tk * tn + tn + tm * tn) * itemsize
    if not out_is_f32:
        vmem_bytes += tm * tn * 4
    vmem_limit = int(min(max(2 * vmem_bytes, 8 << 20), vmem_cap))

    out = pl.pallas_call(
        kernel,
        out_shape=jax.ShapeDtypeStruct((Bp, Np), x.dtype),
        grid_spec=pltpu.PrefetchScalarGridSpec(
            num_scalar_prefetch=0,
            grid=grid,
            in_specs=[
                pl.BlockSpec((tm, tk), lambda i, j, k: (i, k)),  # x tile
                pl.BlockSpec((tk, tn), lambda i, j, k: (k, j)),  # W tile
                pl.BlockSpec((1, tn), lambda i, j, k: (0, j)),   # bias tile
            ],
            out_specs=pl.BlockSpec((tm, tn), lambda i, j, k: (i, j)),
            scratch_shapes=scratch,
        ),
        compiler_params=pltpu.CompilerParams(
            dimension_semantics=("parallel", "parallel", "arbitrary"),
            vmem_limit_bytes=vmem_limit,
        ),
        cost_estimate=cost,
    )(xp, wp, bp)

    if Bp != B or Np != d_out:
        out = out[:B, :d_out]
    return out


class PallasLinear:
    """y = x @ W + b with W stored (input_dim, output_dim), b (output_dim,)."""

    # Whole-problem-in-one-VMEM-block threshold (bytes) for the fast path.
    _SMALL_LIMIT = 2 << 20

    def __init__(self, w, b):
        d_in, d_out = w.shape
        self.d_in, self.d_out = d_in, d_out
        self.dtype = w.dtype
        self.cfg = _generation_config()
        self.sub = _sublane_align(w.dtype)

        b2 = jnp.reshape(b, (1, d_out))
        # Fast-path params: used unpadded.
        self.w_small, self.b_small = w, b2
        self._small_fwd = jax.jit(_linear_small)

        # Large-path params: lane-align K/N and pad W/b ONCE at setup time.
        Kp = _round_up(d_in, 128)
        Np = _round_up(d_out, 128)
        self.Kp, self.Np = Kp, Np
        # Tiles that exactly divide the aligned dims (no double round-up).
        self.tn = _pick_tile(Np, self.cfg["tn"], 128)
        self.tk = _pick_tile(Kp, self.cfg["tk"], 128)
        if Kp == d_in and Np == d_out:
            self.wp = w
        else:
            self.wp = jnp.pad(w, ((0, Kp - d_in), (0, Np - d_out)))
        self.bp = b2 if Np == d_out else jnp.pad(b2, ((0, 0), (0, Np - d_out)))

    def _is_small(self, B):
        itemsize = jnp.dtype(self.dtype).itemsize
        elems = B * self.d_in + self.d_in * self.d_out + B * self.d_out
        return elems * itemsize + B * self.d_out * 4 <= self._SMALL_LIMIT

    def __call__(self, x):
        B = x.shape[0]
        if self._is_small(B):
            # Overhead-free path: no padding, no grid, no accumulator.
            return self._small_fwd(x, self.w_small, self.b_small)

        Bp = _round_up(B, self.sub)
        tm = _pick_tile(Bp, self.cfg["tm"], self.sub)
        tn = self.tn
        # v7x: make sure both TensorCores get output tiles along the
        # "parallel" grid axes (no effect on single-TC v5e/v6e).
        if self.cfg["two_tc"] and (Bp // tm) * (self.Np // tn) < 2:
            if tn >= 256 and (tn // 2) % 128 == 0:
                tn //= 2
            elif tm >= 2 * self.sub and (tm // 2) % self.sub == 0:
                tm //= 2
        return _linear_large(
            x,
            self.wp,
            self.bp,
            tm=tm,
            tn=tn,
            tk=self.tk,
            d_out=self.d_out,
            vmem_cap=self.cfg["vmem_cap"],
        )


if __name__ == "__main__":
    key = jax.random.PRNGKey(0)
    kx, kw, kb, k2x, k2w, k2b = jax.random.split(key, 6)

    # --- Module config from the spec: LinearRegressionModule(32, 16), batch=8.
    input_dim, output_dim, batch = 32, 16, 8
    bound = 1.0 / jnp.sqrt(jnp.float32(input_dim))
    w = jax.random.uniform(kw, (input_dim, output_dim), jnp.float32, -bound, bound)
    b = jax.random.uniform(kb, (output_dim,), jnp.float32, -bound, bound)
    x = jax.random.normal(kx, (batch, input_dim), jnp.float32)

    layer = PallasLinear(w, b)
    y = layer(x)
    jax.block_until_ready(y)
    y_ref = x @ w + b[None, :]
    assert y.shape == (batch, output_dim)
    assert jnp.allclose(y, y_ref, atol=1e-5, rtol=1e-5)

    # --- Also exercise the tiled large-shape path (weight-streaming regime).
    B2, D_in2, D_out2 = 512, 1024, 768
    bound2 = 1.0 / jnp.sqrt(jnp.float32(D_in2))
    w2 = jax.random.uniform(k2w, (D_in2, D_out2), jnp.float32, -bound2, bound2)
    b2 = jax.random.uniform(k2b, (D_out2,), jnp.float32, -bound2, bound2)
    x2 = jax.random.normal(k2x, (B2, D_in2), jnp.float32)

    layer2 = PallasLinear(w2, b2)
    y2 = layer2(x2)
    jax.block_until_ready(y2)
    y2_ref = x2 @ w2 + b2[None, :]
    assert y2.shape == (B2, D_out2)
    # Looser tolerance: MXU f32 matmuls may use bf16 passes in both paths.
    assert jnp.allclose(y2, y2_ref, atol=2e-2, rtol=2e-2)

    print("KERNEL_OK")
</pallas_src>

<mosaic_0001>
module attributes {stable_mosaic.version = 11 : i64} {
  func.func @_linear_small_kernel(%arg0: memref<8x32xf32, #tpu.memory_space<vmem>>, %arg1: memref<32x16xf32, #tpu.memory_space<vmem>>, %arg2: memref<1x16xf32, #tpu.memory_space<vmem>>, %arg3: memref<8x16xf32, #tpu.memory_space<vmem>>) attributes {dimension_semantics = [], scalar_prefetch = 0 : i64, scratch_operands = 0 : i64, tpu.core_type = #tpu.core_type<tc>} {
    %c0 = arith.constant 0 : index
    %c0_0 = arith.constant 0 : index
    %0 = vector.load %arg0[%c0, %c0_0] : memref<8x32xf32, #tpu.memory_space<vmem>>, vector<8x32xf32>
    %c0_1 = arith.constant 0 : index
    %c0_2 = arith.constant 0 : index
    %1 = vector.load %arg1[%c0_1, %c0_2] : memref<32x16xf32, #tpu.memory_space<vmem>>, vector<32x16xf32>
    %cst = arith.constant dense<0.000000e+00> : vector<8x16xf32>
    %2 = tpu.matmul %0, %1, %cst {dimension_numbers = #tpu.dot_dimension_numbers<[1], [0], [0], [1], [0, 0, 1, 1], [], []>} : vector<8x32xf32>, vector<32x16xf32>, vector<8x16xf32> -> vector<8x16xf32>
    %c0_3 = arith.constant 0 : index
    %c0_4 = arith.constant 0 : index
    %3 = vector.load %arg2[%c0_3, %c0_4] : memref<1x16xf32, #tpu.memory_space<vmem>>, vector<1x16xf32>
    %4 = vector.broadcast %3 : vector<1x16xf32> to vector<8x16xf32>
    %5 = arith.addf %2, %4 : vector<8x16xf32>
    %c0_5 = arith.constant 0 : index
    %c0_6 = arith.constant 0 : index
    %6 = vector.load %arg3[%c0_5, %c0_6] : memref<8x16xf32, #tpu.memory_space<vmem>>, vector<8x16xf32>
    tpu.vector_store %arg3[%c0_5, %c0_6], %5 {strides = array<i32>} : memref<8x16xf32, #tpu.memory_space<vmem>>, vector<8x16xf32>,
    return
  }
}

</mosaic_0001>

<llo_original>
// kernel: _linear_small.1
$region0: #{_linear_small.1}
  #allocation0 [shape = 'u32[]', space=smem, size = 0x4, offset = 0x4, fixed_abs, tag = 'smem constant byte address 0x4 - core index']
  #allocation1 [shape = 'u32[144,128]{1,0:T(1,128)}', space=vmem, size = 0x12000, scoped, tag = 'internal scratch']
  %s0 = inlined_call_operand.vmem [shape: f32[8,32], index: 0, kind: input, shape index: {}]
  %s1 = inlined_call_operand.vmem [shape: f32[32,16], index: 1, kind: input, shape index: {}]
  %s2 = inlined_call_operand.vmem [shape: f32[1,16], index: 2, kind: input, shape index: {}]
  %s3 = inlined_call_operand.hbm [shape: f32[8,16], index: 3, kind: output, shape index: {}]
  %s4 = sld [smem:[#allocation0]]
  $region22: #{_linear_small.1} parent=0
    _
  %s6 = ssub.s32 1, %s4
  %s7 = scalar_select 0, %s6, %s4
  $region1: #{_linear_small.1} parent=0
    #allocation2 [shape = 'u8[4096]{0}', space=vmem, size = 0x1000, scoped, tag = 'output window, operand 0, single buffered']
    #allocation3 [shape = 's32[1]{0}', space=sflag, size = 0x4, scoped, tag = 'scoped memory for _linear_small.1']
    %8 = vsyncpa [#allocation3], 0
    // Predicated region
    $region2: #{_linear_small.1} parent=1 // pred_check
      _
    $region3: #{_linear_small.1} parent=1 // pred_check_branch
      %10 = sbr.rel (0) target = $region5
    $region4: #{_linear_small.1} parent=1 // pred_region
      _
    $region5: #{_linear_small.1} parent=1 // pred_fallthru
      _
    // Predicated region
    $region6: #{_linear_small.1} parent=1 // pred_check
      _
    $region7: #{_linear_small.1} parent=1 // pred_check_branch
      %12 = sbr.rel (0) target = $region9
    $region8: #{_linear_small.1} parent=1 // pred_region
      _
    $region9: #{_linear_small.1} parent=1 // pred_fallthru
      _
    // Predicated region
    $region10: #{_linear_small.1} parent=1 // pred_check
      _
    $region11: #{_linear_small.1} parent=1 // pred_check_branch
      %14 = sbr.rel (0) target = $region13
    $region12: #{_linear_small.1} parent=1 // pred_region
      _
    $region13: #{_linear_small.1} parent=1 // pred_fallthru
      _
    %v15 = vld [vmem:[%s0] sm:$0xff]
    %v16 = vld [vmem:[%s1] sm:$0xff]
    %v17 = vld [vmem:[%s1 + $0x8] sm:$0xff]
    %v18 = vld [vmem:[%s1 + $0x10] sm:$0xff]
    %v19 = vld [vmem:[%s1 + $0x18] sm:$0xff]
    %v20 = vld [vmem:[%s2] sm:$0x1]
    %v22 = vlaneseq
    %v23 = vshrl.u32 %v22, 7
    %v24 = vsub.s32 0, %v23
    %v25 = vrot.slane %v20, %v24
    %vm27 = vcmask 261120
    %v29 = vsel %vm27, %v15, 0
    %31 = vmatprep.subr.mxu0 0.0
    %32 = vmatpush1.msra.mxu0 0.0
    %33 = vmatprep.subr.mxu0 0.0
    %34 = vmatpush1.msra.mxu0 0.0
    %35 = vmatprep.subr.mxu0 0.0
    %36 = vmatpush1.msra.mxu0 0.0
    %37 = vmatprep.subr.mxu0 0.0
    %38 = vmatpush1.msra.mxu0 0.0
    %39 = vmatprep.subr.mxu0 0.0
    %40 = vmatpush1.msra.mxu0 0.0
    %41 = vmatprep.subr.mxu0 0.0
    %42 = vmatpush1.msra.mxu0 0.0
    %43 = vmatprep.subr.mxu0 0.0
    %44 = vmatpush1.msra.mxu0 0.0
    %45 = vmatprep.subr.mxu0 0.0
    %46 = vmatpush1.msra.mxu0 0.0
    %47 = vmatprep.subr.mxu0 0.0
    %48 = vmatpush1.msra.mxu0 0.0
    %49 = vmatprep.subr.mxu0 0.0
    %50 = vmatpush1.msra.mxu0 0.0
    %51 = vmatprep.subr.mxu0 0.0
    %52 = vmatpush1.msra.mxu0 0.0
    %53 = vmatprep.subr.mxu0 0.0
    %54 = vmatpush1.msra.mxu0 0.0
    %55 = vmatprep.subr.mxu0 0.0
    %56 = vmatpush1.msra.mxu0 %v19
    %57 = vmatprep.subr.mxu0 0.0
    %58 = vmatpush1.msra.mxu0 %v18
    %59 = vmatprep.subr.mxu0 0.0
    %60 = vmatpush1.msra.mxu0 %v17
    %61 = vmatprep.subr.mxu0 0.0
    %62 = vmatpush1.msra.mxu0 %v16
    %63 = vmatprep.subr.mxu0 0.0
    %64 = vmatpush2.msra.mxu0 0.0
    %65 = vmatprep.subr.mxu0 0.0
    %66 = vmatpush2.msra.mxu0 0.0
    %67 = vmatprep.subr.mxu0 0.0
    %68 = vmatpush2.msra.mxu0 0.0
    %69 = vmatprep.subr.mxu0 0.0
    %70 = vmatpush2.msra.mxu0 0.0
    %71 = vmatprep.subr.mxu0 0.0
    %72 = vmatpush2.msra.mxu0 0.0
    %73 = vmatprep.subr.mxu0 0.0
    %74 = vmatpush2.msra.mxu0 0.0
    %75 = vmatprep.subr.mxu0 0.0
    %76 = vmatpush2.msra.mxu0 0.0
    %77 = vmatprep.subr.mxu0 0.0
    %78 = vmatpush2.msra.mxu0 0.0
    %79 = vmatprep.subr.mxu0 0.0
    %80 = vmatpush2.msra.mxu0 0.0
    %81 = vmatprep.subr.mxu0 0.0
    %82 = vmatpush2.msra.mxu0 0.0
    %83 = vmatprep.subr.mxu0 0.0
    %84 = vmatpush2.msra.mxu0 0.0
    %85 = vmatprep.subr.mxu0 0.0
    %86 = vmatpush2.msra.mxu0 0.0
    %87 = vmatprep.subr.mxu0 0.0
    %88 = vmatpush2.msra.mxu0 0.0
    %89 = vmatprep.subr.mxu0 0.0
    %90 = vmatpush2.msra.mxu0 0.0
    %91 = vmatprep.subr.mxu0 0.0
    %92 = vmatpush2.msra.mxu0 0.0
    %93 = vmatprep.subr.mxu0 0.0
    %94 = vmatpush2.msra.mxu0 0.0
    %95 = vmatprep.mubr.f32.mxu0 0.0
    %96 = vmatmul.mubr.f32.gmra.mxu0 %v29
    %v97 = vpop.f32.mrf.mxu0
    %v98 = vadd.f32 %v25, %v97
    %v99 = vpop.f32.mrf.mxu0
    %100 = vdwg.mxu0
    %vm101 = vcmask 130048
    %102 = vst.msk [vmem:[#allocation2] sm:$0xff] %vm101, %v98
    // Predicated region
    $region14: #{_linear_small.1} parent=1 // pred_check
      _
    $region15: #{_linear_small.1} parent=1 // pred_check_branch
      %104 = sbr.rel (0) target = $region17
    $region16: #{_linear_small.1} parent=1 // pred_region
      %s106 = ssub.s32 128, 128
      %107 = vsyncadd [#allocation3], %s106
      %s109 = sshll.u32 [#allocation2], 4
      %s110 = int_to_ptr.vmem [resolvable:$true] %s109
      %112 = dma.vmem_to_hbm [thread:$0]  %s110, 128, %s3, [#allocation3]
    $region17: #{_linear_small.1} parent=1 // pred_fallthru
      _
    // Predicated region
    $region18: #{_linear_small.1} parent=1 // pred_check
      _
    $region19: #{_linear_small.1} parent=1 // pred_check_branch
      %114 = sbr.rel (0) target = $region21
    $region20: #{_linear_small.1} parent=1 // pred_region
      %115 = dma.done [#allocation3], 128
    $region21: #{_linear_small.1} parent=1 // pred_fallthru
      _
    %116 = vsyncpa [#allocation3], 1

</llo_original>
